<compile_context>
chip_gen: v6e
topology: v6e:2x2x1
jax: 0.10.0
libtpu: 0.0.40
codegen_flags: <defaults>
</compile_context>

<pallas_src>
import jax
import jax.numpy as jnp
from jax.experimental import pallas as pl
from jax.experimental.pallas import tpu as pltpu


def _round_up(n: int, m: int) -> int:
    return ((n + m - 1) // m) * m


def _default_block_budget_bytes() -> int:
    """Per-block x budget.  4 MiB everywhere (double-buffered 8 MiB fits the
    v5e 16 MiB scoped default); bump to 8 MiB on v7x, whose faster HBM needs
    bigger blocks to amortize the ~0.35 us per-step pipeline overhead."""
    try:
        info = pltpu.get_tpu_info()
        # v7x exposes 64 MiB VMEM per TensorCore; v5e/v6e expose 128 MiB.
        if info.vmem_capacity_bytes <= (64 << 20):
            return 8 << 20
    except Exception:
        pass
    return 4 << 20


def _auto_tile_b(batch: int, dim: int, budget_bytes: int | None = None) -> int:
    """Largest batch tile (multiple of 8 rows) whose f32 x block is ~budget.

    Byte-based (no fixed row cap) so small-D shapes still get MiB-scale blocks
    and stay near the HBM roofline.  If the whole batch fits in one block but
    the block is >= 1 MiB, split into two tiles so the parallel batch axis can
    use both v7x TensorCores.
    """
    if budget_bytes is None:
        budget_bytes = _default_block_budget_bytes()
    rows = budget_bytes // (dim * 4)          # f32 rows per block
    rows = max(8, (rows // 8) * 8)
    b8 = _round_up(batch, 8)
    if b8 <= rows:
        if b8 * dim * 4 >= (1 << 20) and b8 >= 16:
            return _round_up(b8 // 2, 8)      # 2 parallel tiles for megacore
        return b8
    return rows


def _conj_log_kernel(x_ref, c_ref, s_ref, o_ref):
    # x_ref: (tb, D), c_ref/s_ref: (1, D), o_ref: (tb, 1)
    x = x_ref[...]
    z = s_ref[...] * (x - c_ref[...])                       # exponent
    # Stable softplus: log(1 + exp(z)) = max(z, 0) + log(1 + exp(-|z|)).
    # exp argument is always <= 0, so no overflow for large positive z.
    sp = jnp.maximum(z, 0.0) + jnp.log(1.0 + jnp.exp(-jnp.abs(z)))
    # prod_d 1/(1+exp(z)) == exp(-sum_d softplus(z)); add-reduce over lanes.
    o_ref[...] = jnp.exp(-jnp.sum(sp, axis=1, keepdims=True))


def conj_log_forward(x, centers, steepnesses, *, tile_b=None):
    """x: (B, D) f32; centers/steepnesses: (D,) f32; returns (B,) f32."""
    B, D = x.shape
    x = x.astype(jnp.float32)
    c2 = centers.reshape(1, D).astype(jnp.float32)
    s2 = steepnesses.reshape(1, D).astype(jnp.float32)

    if tile_b is None:
        tile_b = _auto_tile_b(B, D)
    tile_b = max(8, (int(tile_b) // 8) * 8)

    num_tiles = pl.cdiv(B, tile_b)   # ragged tail handled by output masking

    out = pl.pallas_call(
        _conj_log_kernel,
        out_shape=jax.ShapeDtypeStruct((B, 1), jnp.float32),
        grid_spec=pltpu.PrefetchScalarGridSpec(
            num_scalar_prefetch=0,
            grid=(num_tiles,),
            in_specs=[
                pl.BlockSpec((tile_b, D), lambda i: (i, 0)),
                pl.BlockSpec((1, D), lambda i: (0, 0)),
                pl.BlockSpec((1, D), lambda i: (0, 0)),
            ],
            out_specs=pl.BlockSpec((tile_b, 1), lambda i: (i, 0)),
        ),
        compiler_params=pltpu.CompilerParams(
            dimension_semantics=("parallel",),
        ),
    )(x, c2, s2)
    return out[:, 0]


if __name__ == "__main__":
    key = jax.random.PRNGKey(0)
    kx, kc, ks = jax.random.split(key, 3)

    batch, dim = 10, 32  # ragged batch exercises the masked partial tail tile

    x = jax.random.normal(kx, (batch, dim), dtype=jnp.float32)
    # Matches nn.init.uniform_(param, 0, 10) of the module (deterministic here).
    centers = jax.random.uniform(kc, (dim,), minval=0.0, maxval=10.0,
                                 dtype=jnp.float32)
    steepnesses = jax.random.uniform(ks, (dim,), minval=0.0, maxval=10.0,
                                     dtype=jnp.float32)

    out = conj_log_forward(x, centers, steepnesses)
    out = jax.block_until_ready(out)

    # Plain-JAX reference of the exact PyTorch semantics.
    z = steepnesses[None, :] * (x - centers[None, :])
    ref = jnp.prod(1.0 / (1.0 + jnp.exp(z)), axis=1)

    assert out.shape == (batch,)
    assert bool(jnp.allclose(out, ref, rtol=2e-4, atol=1e-30)), "mismatch vs reference"
    print("KERNEL_OK")
</pallas_src>

<mosaic_0001>
module attributes {stable_mosaic.version = 11 : i64} {
  func.func @_conj_log_kernel(%arg0: i32, %arg1: memref<16x32xf32, #tpu.memory_space<vmem>>, %arg2: memref<1x32xf32, #tpu.memory_space<vmem>>, %arg3: memref<1x32xf32, #tpu.memory_space<vmem>>, %arg4: memref<16x1xf32, #tpu.memory_space<vmem>>) attributes {dimension_semantics = [#tpu.dimension_semantics<parallel>], iteration_bounds = array<i64: 1>, scalar_prefetch = 0 : i64, scratch_operands = 0 : i64, tpu.core_type = #tpu.core_type<tc>, window_params = [{transform_indices = @transform_0, window_bounds = array<i64: 16, 32>}, {pipeline_mode = #tpu.pipeline_mode<synchronous>, transform_indices = @transform_1, window_bounds = array<i64: 1, 32>}, {pipeline_mode = #tpu.pipeline_mode<synchronous>, transform_indices = @transform_2, window_bounds = array<i64: 1, 32>}, {transform_indices = @transform_3, window_bounds = array<i64: 16, 1>}]} {
    %c0 = arith.constant 0 : index
    %c0_0 = arith.constant 0 : index
    %0 = vector.load %arg1[%c0, %c0_0] : memref<16x32xf32, #tpu.memory_space<vmem>>, vector<16x32xf32>
    %c0_1 = arith.constant 0 : index
    %c0_2 = arith.constant 0 : index
    %1 = vector.load %arg3[%c0_1, %c0_2] : memref<1x32xf32, #tpu.memory_space<vmem>>, vector<1x32xf32>
    %c0_3 = arith.constant 0 : index
    %c0_4 = arith.constant 0 : index
    %2 = vector.load %arg2[%c0_3, %c0_4] : memref<1x32xf32, #tpu.memory_space<vmem>>, vector<1x32xf32>
    %3 = vector.broadcast %2 : vector<1x32xf32> to vector<16x32xf32>
    %4 = arith.subf %0, %3 : vector<16x32xf32>
    %5 = vector.broadcast %1 : vector<1x32xf32> to vector<16x32xf32>
    %6 = arith.mulf %5, %4 : vector<16x32xf32>
    %cst = arith.constant 0.000000e+00 : f32
    %7 = vector.broadcast %cst : f32 to vector<16x32xf32>
    %8 = arith.maximumf %6, %7 : vector<16x32xf32>
    %9 = math.absf %6 : vector<16x32xf32>
    %cst_5 = arith.constant 0.000000e+00 : f32
    %10 = vector.broadcast %cst_5 : f32 to vector<16x32xf32>
    %11 = arith.subf %10, %9 : vector<16x32xf32>
    %12 = math.exp %11 : vector<16x32xf32>
    %cst_6 = arith.constant 1.000000e+00 : f32
    %13 = vector.broadcast %cst_6 : f32 to vector<16x32xf32>
    %14 = arith.addf %13, %12 : vector<16x32xf32>
    %15 = math.log %14 : vector<16x32xf32>
    %16 = arith.addf %8, %15 : vector<16x32xf32>
    %cst_7 = arith.constant dense<0.000000e+00> : vector<16xf32>
    %17 = vector.multi_reduction <add>, %16, %cst_7 [1] : vector<16x32xf32> to vector<16xf32>
    %18 = vector.shape_cast %17 : vector<16xf32> to vector<16x1xf32>
    %cst_8 = arith.constant 0.000000e+00 : f32
    %19 = vector.broadcast %cst_8 : f32 to vector<16x1xf32>
    %20 = arith.subf %19, %18 : vector<16x1xf32>
    %21 = math.exp %20 : vector<16x1xf32>
    %c0_9 = arith.constant 0 : index
    %c0_10 = arith.constant 0 : index
    %22 = vector.load %arg4[%c0_9, %c0_10] : memref<16x1xf32, #tpu.memory_space<vmem>>, vector<16x1xf32>
    tpu.vector_store %arg4[%c0_9, %c0_10], %21 {strides = array<i32>} : memref<16x1xf32, #tpu.memory_space<vmem>>, vector<16x1xf32>,
    return
  }
  func.func @transform_0(%arg0: i32) -> (i32, i32) {
    %c0_i32 = arith.constant 0 : i32
    %c0_i32_0 = arith.constant 0 : i32
    return %arg0, %c0_i32 : i32, i32
  }
  func.func @transform_1(%arg0: i32) -> (i32, i32) {
    %c0_i32 = arith.constant 0 : i32
    %c0_i32_0 = arith.constant 0 : i32
    %c0_i32_1 = arith.constant 0 : i32
    return %c0_i32, %c0_i32_0 : i32, i32
  }
  func.func @transform_2(%arg0: i32) -> (i32, i32) {
    %c0_i32 = arith.constant 0 : i32
    %c0_i32_0 = arith.constant 0 : i32
    %c0_i32_1 = arith.constant 0 : i32
    return %c0_i32, %c0_i32_0 : i32, i32
  }
  func.func @transform_3(%arg0: i32) -> (i32, i32) {
    %c0_i32 = arith.constant 0 : i32
    %c0_i32_0 = arith.constant 0 : i32
    return %arg0, %c0_i32 : i32, i32
  }
}

</mosaic_0001>

<llo_original>
// kernel: tpu_custom_call.1
$region0: #{tpu_custom_call.1}
  #allocation0 [shape = 'u32[]', space=smem, size = 0x4, offset = 0x4, fixed_abs, tag = 'smem constant byte address 0x4 - core index']
  #allocation1 [shape = 'u32[144,128]{1,0:T(1,128)}', space=vmem, size = 0x12000, scoped, tag = 'internal scratch']
  %s0 = inlined_call_operand.hbm [shape: f32[10,32], index: 0, kind: input, shape index: {}]
  %s1 = inlined_call_operand.vmem [shape: f32[1,32], index: 1, kind: input, shape index: {}]
  %s2 = inlined_call_operand.vmem [shape: f32[1,32], index: 2, kind: input, shape index: {}]
  %s3 = inlined_call_operand.vmem [shape: f32[10,1], index: 3, kind: output, shape index: {}]
  %s4 = sld [smem:[#allocation0]]
  $region26: #{tpu_custom_call.1} parent=0
    _
  %s6 = ssub.s32 1, %s4
  %s7 = scalar_select 0, %s6, %s4
  $region1: #{tpu_custom_call.1} parent=0
    #allocation2 [shape = 'u8[8192]{0}', space=vmem, size = 0x2000, scoped, tag = 'input window, operand 0, single buffered']
    #allocation3 [shape = 's32[1]{0}', space=sflag, size = 0x4, scoped, tag = 'scoped memory for tpu_custom_call.1']
    %8 = vsyncpa [#allocation3], 0
    // Predicated region
    $region2: #{tpu_custom_call.1} parent=1 // pred_check
      _
    $region3: #{tpu_custom_call.1} parent=1 // pred_check_branch
      %10 = sbr.rel (0) target = $region5
    $region4: #{tpu_custom_call.1} parent=1 // pred_region
      %s12 = ssub.s32 256, 256
      %13 = vsyncadd [#allocation3], %s12
      %s14 = sshll.u32 [#allocation2], 4
      %s15 = int_to_ptr.vmem [resolvable:$true] %s14
      %20 = dma.hbm_to_vmem [thread:$0]  %s0, 256, %s15, [#allocation3], 128, 128, 8
    $region5: #{tpu_custom_call.1} parent=1 // pred_fallthru
      _
    // Predicated region
    $region6: #{tpu_custom_call.1} parent=1 // pred_check
      _
    $region7: #{tpu_custom_call.1} parent=1 // pred_check_branch
      %22 = sbr.rel (0) target = $region9
    $region8: #{tpu_custom_call.1} parent=1 // pred_region
      _
    $region9: #{tpu_custom_call.1} parent=1 // pred_fallthru
      _
    // Predicated region
    $region10: #{tpu_custom_call.1} parent=1 // pred_check
      _
    $region11: #{tpu_custom_call.1} parent=1 // pred_check_branch
      %24 = sbr.rel (0) target = $region13
    $region12: #{tpu_custom_call.1} parent=1 // pred_region
      _
    $region13: #{tpu_custom_call.1} parent=1 // pred_fallthru
      _
    // Predicated region
    $region14: #{tpu_custom_call.1} parent=1 // pred_check
      _
    $region15: #{tpu_custom_call.1} parent=1 // pred_check_branch
      %26 = sbr.rel (0) target = $region17
    $region16: #{tpu_custom_call.1} parent=1 // pred_region
      %27 = dma.done [#allocation3], 256
    $region17: #{tpu_custom_call.1} parent=1 // pred_fallthru
      _
    %v28 = vld [vmem:[#allocation2] sm:$0xff]
    %v29 = vld [vmem:[#allocation2 + $0x8] sm:$0xff]
    %v30 = vld [vmem:[%s2] sm:$0x1]
    %v31 = vld [vmem:[%s1] sm:$0x1]
    %v33 = vlaneseq
    %v34 = vshrl.u32 %v33, 7
    %v35 = vsub.s32 0, %v34
    %v36 = vrot.slane %v31, %v35
    %v38 = vsub.f32 %v28, %v36
    %v39 = vsub.f32 %v29, %v36
    %v41 = vlaneseq
    %v42 = vshrl.u32 %v41, 7
    %v43 = vsub.s32 0, %v42
    %v44 = vrot.slane %v30, %v43
    %v46 = vmul.f32 %v44, %v38
    %v47 = vmul.f32 %v44, %v39
    %v48 = vmax.f32 %v46, 0.0
    %v49 = vmax.f32 %v47, 0.0
    %v50 = vand.u32 2147483647, %v46
    %v51 = vand.u32 2147483647, %v47
    %v52 = vsub.f32 0.0, %v50
    %v53 = vsub.f32 0.0, %v51
    %v54 = vmul.f32 %v52, 1.442695
    %v55 = vpow.pop %v54
    %v56 = vmul.f32 %v53, 1.442695
    %v57 = vpow.pop %v56
    %v58 = vadd.f32 %v55, 1.0
    %v59 = vadd.f32 %v57, 1.0
    %v60 = vlog2.pop %v58
    %v61 = vmul.f32 %v60, 0.6931472
    %v62 = vlog2.pop %v59
    %v63 = vmul.f32 %v62, 0.6931472
    %v64 = vadd.f32 %v48, %v61
    %v65 = vadd.f32 %v49, %v63
    %vm66 = vcmask 261120
    %v67 = vsel %vm66, %v64, 0.0
    %68 = vadd.xlane.f32.xlu0 %v67
    %v69 = vpop.xlane.xlu0 %68
    %v70 = vsel %vm66, %v65, 0.0
    %71 = vadd.xlane.f32.xlu0 %v70
    %v72 = vpop.xlane.xlu0 %71
    %v73 = vsub.f32 0.0, %v69
    %v74 = vsub.f32 0.0, %v72
    %v75 = vmul.f32 %v73, 1.442695
    %v76 = vpow.pop %v75
    %v77 = vmul.f32 %v74, 1.442695
    %v78 = vpow.pop %v77
    %vm79 = vcmask 7168
    %80 = vst.msk [vmem:[%s3] sm:$0xff] %vm79, %v76
    %81 = vst.msk [vmem:[%s3 + $0x8] sm:$0xff] %vm79, %v78
    // Predicated region
    $region18: #{tpu_custom_call.1} parent=1 // pred_check
      _
    $region19: #{tpu_custom_call.1} parent=1 // pred_check_branch
      %83 = sbr.rel (0) target = $region21
    $region20: #{tpu_custom_call.1} parent=1 // pred_region
      _
    $region21: #{tpu_custom_call.1} parent=1 // pred_fallthru
      _
    // Predicated region
    $region22: #{tpu_custom_call.1} parent=1 // pred_check
      _
    $region23: #{tpu_custom_call.1} parent=1 // pred_check_branch
      %85 = sbr.rel (0) target = $region25
    $region24: #{tpu_custom_call.1} parent=1 // pred_region
      _
    $region25: #{tpu_custom_call.1} parent=1 // pred_fallthru
      _
    %86 = vsyncpa [#allocation3], 1

</llo_original>
